<compile_context>
chip_gen: v7x
topology: tpu7x:2x2x1
jax: 0.10.0
libtpu: 0.0.40
codegen_flags: <defaults>
</compile_context>

<pallas_src>
import jax
import jax.numpy as jnp
from jax.experimental import pallas as pl
from jax.experimental.pallas import tpu as pltpu


# ----------------------------------------------------------------------------
# Kernel body
# ----------------------------------------------------------------------------
def _rescls_kernel(x_ref, w_ref, b_ref, o_ref, acc_ref):
    # x_ref: (TN, C, THW)   w_ref: (C, NC_PAD)  (already scaled by 1/HW)
    # b_ref: (1, NC_PAD)    o_ref: (TN, NC_PAD)  acc_ref: (TN, C) f32 scratch
    k = pl.program_id(1)

    @pl.when(k == 0)
    def _init():
        acc_ref[...] = jnp.zeros_like(acc_ref)

    # Partial spatial sum over this HW tile (cross-lane reduce -> XLU slot;
    # the loop is HBM-bound so this is free filler).
    acc_ref[...] += jnp.sum(x_ref[...].astype(jnp.float32), axis=-1)

    @pl.when(k == pl.num_programs(1) - 1)
    def _finalize():
        logits = jnp.dot(acc_ref[...], w_ref[...],
                         preferred_element_type=jnp.float32)   # (TN, NC_PAD)
        o_ref[...] = logits + b_ref[...]


# ----------------------------------------------------------------------------
# Tiling helpers
# ----------------------------------------------------------------------------
def _round_up(x, m):
    return ((x + m - 1) // m) * m


def _largest_divisor_multiple(total, align, cap):
    """Largest d with d % align == 0, total % d == 0 and d <= cap (None if none)."""
    cap = min(cap, total)
    best = None
    d = align
    while d <= cap:
        if total % d == 0:
            best = d
        d += align
    return best


def _vmem_budget_bytes():
    """Generation-aware VMEM capacity and per-input-buffer streaming budget."""
    try:
        cap = int(pltpu.get_tpu_info().vmem_capacity_bytes)
    except Exception:
        cap = 64 * 1024 * 1024       # v7x (64 MiB/TC) is the tightest generation
    # Double-buffered input dominates the footprint; keep 2*per_buf well under cap.
    per_buf = min(cap // 6, 24 * 1024 * 1024)   # ~10.6 MiB on v7x, ~21 MiB on v5e/v6e
    return cap, per_buf


def _choose_tiles(N, C, HW, elem_bytes, per_buf_budget, tile_n=None, tile_hw=None):
    """tile_hw-first selection: maximize contiguous DMA run length, then grow tile_n."""
    row_bytes = C * elem_bytes

    # ---- tile_hw first (longest contiguous HBM runs) ----
    if tile_hw is None:
        tile_n_min = 8 if N >= 8 else max(N, 1)
        hw_budget = max(128, per_buf_budget // max(1, tile_n_min * row_bytes))
        if HW <= hw_budget:
            tile_hw = HW                                   # full spatial: contiguous row
        else:
            tile_hw = max(128, (hw_budget // 128) * 128)   # lane-aligned partial tile
    HW_pad = HW if tile_hw >= HW else _round_up(HW, tile_hw)
    tile_hw = min(tile_hw, HW_pad)

    # ---- then tile_n under the remaining budget ----
    if tile_n is None:
        n_budget = max(1, per_buf_budget // max(1, tile_hw * row_bytes))
        n_cap = n_budget
        if N >= 16:
            n_cap = min(n_cap, N // 2)   # guarantee >=2 batch programs (v7x dual-TC)
        if N <= 8 or n_cap < 8:
            tile_n = N                   # single full-N block (legal: equals full dim)
        else:
            n_pad8 = _round_up(N, 8)
            tile_n = _largest_divisor_multiple(n_pad8, 8, max(8, (n_cap // 8) * 8)) or 8
    N_pad = N if tile_n >= N else _round_up(N, tile_n)
    tile_n = min(tile_n, N_pad)
    return tile_n, tile_hw, N_pad, HW_pad


# ----------------------------------------------------------------------------
# Parameter prep (hoisted out of the per-call path; do once at init)
# ----------------------------------------------------------------------------
def prepare_rescls_params(weight, bias, hw):
    """weight: (num_class, C), bias: (num_class,). Returns lane-padded, 1/HW-folded params."""
    num_class, C = weight.shape
    nc_pad = max(128, _round_up(num_class, 128))
    w_scaled = weight.T.astype(jnp.float32) / float(hw)        # fold mean's 1/HW
    w_pad = jnp.zeros((C, nc_pad), jnp.float32).at[:, :num_class].set(w_scaled)
    b_pad = jnp.zeros((1, nc_pad), jnp.float32).at[:, :num_class].set(
        bias.astype(jnp.float32)[None, :])
    return w_pad, b_pad, num_class


# ----------------------------------------------------------------------------
# Forward wrapper
# ----------------------------------------------------------------------------
def rescls_less_cnn_forward(x_nchw, w_pad, b_pad, num_class, *, tile_n=None, tile_hw=None):
    """x_nchw: (N, C, H, W) f32 or bf16; w_pad/b_pad from prepare_rescls_params."""
    N, C, H, W = x_nchw.shape
    HW = H * W
    nc_pad = w_pad.shape[1]

    # Free, contiguous reshape (no HBM transpose): pool axis becomes the lane axis.
    x = x_nchw.reshape(N, C, HW)
    elem_bytes = x.dtype.itemsize

    vmem_cap, per_buf_budget = _vmem_budget_bytes()
    tile_n, tile_hw, N_pad, HW_pad = _choose_tiles(
        N, C, HW, elem_bytes, per_buf_budget, tile_n, tile_hw)

    if HW_pad > HW or N_pad > N:
        # Zero padding is sum-neutral; padded batch rows are sliced off below.
        x = jnp.pad(x, ((0, N_pad - N), (0, 0), (0, HW_pad - HW)))

    grid = (N_pad // tile_n, HW_pad // tile_hw)

    # Explicit VMEM limit so a tiling that fits v6e can never silently OOM v7x.
    in_buf = tile_n * C * tile_hw * elem_bytes
    footprint = (2 * in_buf                      # double-buffered input
                 + 2 * C * nc_pad * 4            # resident weight (double-buffered spec)
                 + 2 * nc_pad * 4                # resident bias
                 + 2 * tile_n * nc_pad * 4       # output tile
                 + tile_n * C * 4)               # accumulator scratch
    vmem_limit = int(min(max(footprint + (4 << 20), 32 << 20), vmem_cap))

    cost = pl.CostEstimate(
        flops=int(2 * N_pad * C * HW_pad + 2 * N_pad * C * nc_pad),
        transcendentals=0,
        bytes_accessed=int(N_pad * C * HW_pad * elem_bytes
                           + C * nc_pad * 4 + nc_pad * 4 + N_pad * nc_pad * 4),
    )

    out_padded = pl.pallas_call(
        _rescls_kernel,
        out_shape=jax.ShapeDtypeStruct((N_pad, nc_pad), jnp.float32),
        grid_spec=pltpu.PrefetchScalarGridSpec(
            num_scalar_prefetch=0,
            grid=grid,
            in_specs=[
                pl.BlockSpec((tile_n, C, tile_hw), lambda i, k: (i, 0, k)),
                pl.BlockSpec((C, nc_pad), lambda i, k: (0, 0)),   # resident weight
                pl.BlockSpec((1, nc_pad), lambda i, k: (0, 0)),   # resident bias
            ],
            out_specs=pl.BlockSpec((tile_n, nc_pad), lambda i, k: (i, 0)),
            scratch_shapes=[pltpu.VMEM((tile_n, C), jnp.float32)],
        ),
        compiler_params=pltpu.CompilerParams(
            dimension_semantics=("parallel", "arbitrary"),
            vmem_limit_bytes=vmem_limit),
        cost_estimate=cost,
    )(x, w_pad, b_pad)

    return out_padded[:N, :num_class]


# ----------------------------------------------------------------------------
# Demo / correctness check
# ----------------------------------------------------------------------------
if __name__ == "__main__":
    # Small, module-consistent shapes: filter_num=8, scale=4 -> C=32, num_class=2
    filter_num, scale, num_class = 8, 4, 2
    N, C, H, W = 2, filter_num * scale, 16, 16

    key = jax.random.PRNGKey(0)
    kx, kw = jax.random.split(key)

    x = jax.random.normal(kx, (N, C, H, W), dtype=jnp.float32)

    # weights_init_normal-style deterministic init: N(0, 0.02) weights, zero bias
    weight = 0.02 * jax.random.normal(kw, (num_class, C), dtype=jnp.float32)
    bias = jnp.zeros((num_class,), dtype=jnp.float32)

    # Prepared once at init (padding + 1/HW fold hoisted out of the forward path).
    w_pad, b_pad, nc = prepare_rescls_params(weight, bias, H * W)

    # tile_hw=128 forces a 2-step HW reduction so the accumulate/finalize path
    # (pl.when init + accumulation + finalize matmul) is actually exercised.
    out = rescls_less_cnn_forward(x, w_pad, b_pad, nc, tile_hw=128)
    out = jax.block_until_ready(out)

    # Pure-JAX reference
    ref = jnp.mean(x, axis=(2, 3)) @ weight.T + bias
    assert out.shape == (N, num_class)
    assert jnp.allclose(out, ref, atol=1e-5, rtol=1e-5), "mismatch vs reference"

    print("KERNEL_OK")
</pallas_src>

<mosaic_0001>
module attributes {stable_mosaic.version = 11 : i64} {
  func.func @_rescls_kernel(%arg0: i32, %arg1: i32, %arg2: memref<2x32x128xf32, #tpu.memory_space<vmem>>, %arg3: memref<32x128xf32, #tpu.memory_space<vmem>>, %arg4: memref<1x128xf32, #tpu.memory_space<vmem>>, %arg5: memref<2x128xf32, #tpu.memory_space<vmem>>, %arg6: memref<2x32xf32, #tpu.memory_space<vmem>>) attributes {dimension_semantics = [#tpu.dimension_semantics<parallel>, #tpu.dimension_semantics<arbitrary>], iteration_bounds = array<i64: 1, 2>, scalar_prefetch = 0 : i64, scratch_operands = 1 : i64, tpu.core_type = #tpu.core_type<tc>, window_params = [{transform_indices = @transform_0, window_bounds = array<i64: 2, 32, 128>}, {pipeline_mode = #tpu.pipeline_mode<synchronous>, transform_indices = @transform_1, window_bounds = array<i64: 32, 128>}, {pipeline_mode = #tpu.pipeline_mode<synchronous>, transform_indices = @transform_2, window_bounds = array<i64: 1, 128>}, {transform_indices = @transform_3, window_bounds = array<i64: 2, 128>}]} {
    %c0_i32 = arith.constant 0 : i32
    %0 = arith.cmpi eq, %arg1, %c0_i32 : i32
    %1 = arith.extui %0 : i1 to i32
    %c0_i32_0 = arith.constant 0 : i32
    %2 = arith.cmpi ne, %1, %c0_i32_0 : i32
    scf.if %2 {
      %cst_8 = arith.constant 0.000000e+00 : f32
      %11 = vector.broadcast %cst_8 : f32 to vector<2x32xf32>
      %c0_9 = arith.constant 0 : index
      %c0_10 = arith.constant 0 : index
      %12 = vector.load %arg6[%c0_9, %c0_10] : memref<2x32xf32, #tpu.memory_space<vmem>>, vector<2x32xf32>
      tpu.vector_store %arg6[%c0_9, %c0_10], %11 {strides = array<i32>} : memref<2x32xf32, #tpu.memory_space<vmem>>, vector<2x32xf32>,
    } else {
    }
    %c0 = arith.constant 0 : index
    %c0_1 = arith.constant 0 : index
    %3 = vector.load %arg6[%c0, %c0_1] : memref<2x32xf32, #tpu.memory_space<vmem>>, vector<2x32xf32>
    %c0_2 = arith.constant 0 : index
    %c0_3 = arith.constant 0 : index
    %c0_4 = arith.constant 0 : index
    %4 = vector.load %arg2[%c0_2, %c0_3, %c0_4] : memref<2x32x128xf32, #tpu.memory_space<vmem>>, vector<2x32x128xf32>
    %cst = arith.constant dense<0.000000e+00> : vector<2x32xf32>
    %5 = vector.multi_reduction <add>, %4, %cst [2] : vector<2x32x128xf32> to vector<2x32xf32>
    %6 = arith.addf %3, %5 : vector<2x32xf32>
    %c0_5 = arith.constant 0 : index
    %c0_6 = arith.constant 0 : index
    %7 = vector.load %arg6[%c0_5, %c0_6] : memref<2x32xf32, #tpu.memory_space<vmem>>, vector<2x32xf32>
    tpu.vector_store %arg6[%c0_5, %c0_6], %6 {strides = array<i32>} : memref<2x32xf32, #tpu.memory_space<vmem>>, vector<2x32xf32>,
    %c1_i32 = arith.constant 1 : i32
    %8 = arith.cmpi eq, %arg1, %c1_i32 : i32
    %9 = arith.extui %8 : i1 to i32
    %c0_i32_7 = arith.constant 0 : i32
    %10 = arith.cmpi ne, %9, %c0_i32_7 : i32
    scf.if %10 {
      %c0_8 = arith.constant 0 : index
      %c0_9 = arith.constant 0 : index
      %11 = vector.load %arg6[%c0_8, %c0_9] : memref<2x32xf32, #tpu.memory_space<vmem>>, vector<2x32xf32>
      %c0_10 = arith.constant 0 : index
      %c0_11 = arith.constant 0 : index
      %12 = vector.load %arg3[%c0_10, %c0_11] : memref<32x128xf32, #tpu.memory_space<vmem>>, vector<32x128xf32>
      %cst_12 = arith.constant dense<0.000000e+00> : vector<2x128xf32>
      %13 = tpu.matmul %11, %12, %cst_12 {dimension_numbers = #tpu.dot_dimension_numbers<[1], [0], [0], [1], [0, 0, 1, 1], [], []>} : vector<2x32xf32>, vector<32x128xf32>, vector<2x128xf32> -> vector<2x128xf32>
      %c0_13 = arith.constant 0 : index
      %c0_14 = arith.constant 0 : index
      %14 = vector.load %arg4[%c0_13, %c0_14] : memref<1x128xf32, #tpu.memory_space<vmem>>, vector<1x128xf32>
      %15 = vector.broadcast %14 : vector<1x128xf32> to vector<2x128xf32>
      %16 = arith.addf %13, %15 : vector<2x128xf32>
      %c0_15 = arith.constant 0 : index
      %c0_16 = arith.constant 0 : index
      %17 = vector.load %arg5[%c0_15, %c0_16] : memref<2x128xf32, #tpu.memory_space<vmem>>, vector<2x128xf32>
      tpu.vector_store %arg5[%c0_15, %c0_16], %16 {strides = array<i32>} : memref<2x128xf32, #tpu.memory_space<vmem>>, vector<2x128xf32>,
    } else {
    }
    return
  }
  func.func @transform_0(%arg0: i32, %arg1: i32) -> (i32, i32, i32) {
    %c0_i32 = arith.constant 0 : i32
    %c0_i32_0 = arith.constant 0 : i32
    return %arg0, %c0_i32, %arg1 : i32, i32, i32
  }
  func.func @transform_1(%arg0: i32, %arg1: i32) -> (i32, i32) {
    %c0_i32 = arith.constant 0 : i32
    %c0_i32_0 = arith.constant 0 : i32
    %c0_i32_1 = arith.constant 0 : i32
    return %c0_i32, %c0_i32_0 : i32, i32
  }
  func.func @transform_2(%arg0: i32, %arg1: i32) -> (i32, i32) {
    %c0_i32 = arith.constant 0 : i32
    %c0_i32_0 = arith.constant 0 : i32
    %c0_i32_1 = arith.constant 0 : i32
    return %c0_i32, %c0_i32_0 : i32, i32
  }
  func.func @transform_3(%arg0: i32, %arg1: i32) -> (i32, i32) {
    %c0_i32 = arith.constant 0 : i32
    %c0_i32_0 = arith.constant 0 : i32
    return %arg0, %c0_i32 : i32, i32
  }
}

</mosaic_0001>

<llo_original>
// kernel: tpu_custom_call.1
$region0: #{tpu_custom_call.1}
  #allocation0 [shape = 'u32[]', space=smem, size = 0x4, offset = 0x4, fixed_abs, tag = 'smem constant byte address 0x4 - core index']
  #allocation1 [shape = 'u32[144,128]{1,0:T(1,128)}', space=vmem, size = 0x12000, scoped, tag = 'internal scratch']
  #allocation2 [shape = 'f32[2,32]{1,0:T(2,128)}', space=vmem, size = 0x400, scoped, tag = 'scratch operand']
  %s0 = inlined_call_operand.hbm [shape: f32[2,32,256], index: 0, kind: input, shape index: {}]
  %s1 = inlined_call_operand.hbm [shape: f32[32,128], index: 1, kind: input, shape index: {}]
  %s2 = inlined_call_operand.vmem [shape: f32[1,128], index: 2, kind: input, shape index: {}]
  %s3 = inlined_call_operand.hbm [shape: f32[2,128], index: 3, kind: output, shape index: {}]
  %s4 = sld [smem:[#allocation0]]
  $region61: #{tpu_custom_call.1} parent=0
    _
  %s6 = ssub.s32 1, %s4
  %s7 = scalar_select 0, %s6, %s4
  $region1: #{tpu_custom_call.1} parent=0
    #allocation3 [shape = 'u8[65536]{0}', space=vmem, size = 0x10000, scoped, tag = 'input window, operand 0']
    #allocation4 [shape = 's32[2]{0}', space=sflag, size = 0x8, scoped, tag = 'scoped memory for tpu_custom_call.1']
    #allocation5 [shape = 's32[2]{0}', space=sflag, size = 0x8, scoped, tag = 'scoped memory for tpu_custom_call.1']
    #allocation6 [shape = 'u8[16384]{0}', space=vmem, size = 0x4000, scoped, tag = 'input window, operand 1, single buffered']
    #allocation7 [shape = 's32[1]{0}', space=sflag, size = 0x4, scoped, tag = 'scoped memory for tpu_custom_call.1']
    #allocation8 [shape = 'u8[1024]{0}', space=vmem, size = 0x400, scoped, tag = 'output window, operand 0, single buffered']
    %8 = vsyncpa [#allocation4], 0
    %s9 = scalar_lea.sflag [#allocation4], 1
    %10 = vsyncpa %s9, 0
    %11 = vsyncpa [#allocation7], 0
    %12 = vsyncpa [#allocation5], 0
    loop: start=0, step=1, limit=4
    $region2: #{tpu_custom_call.1} parent=1 // loop_pre_header
      _
    $region3: #{tpu_custom_call.1} parent=1 // loop_header
      %s14 = sphi 0, %s18
      %p15 = scmp.ge.s32.totalorder %s14, 4
      %s21 = sphi 0, %s33
      %s22 = sphi 0, %s29
      %s23 = sphi 0, %s21
      %s24 = sphi 0, %s22
      %s25 = sphi 0, %s23
      %s26 = sphi 0, %s24
      %s38 = sphi 0, %s40
      %s41 = sphi 0, %s38
      %s42 = sphi 0, %s41
      %s58 = sphi 0, %s42
      %s62 = sphi 0, %s62
      %s64 = sphi 0, %s62
      %s65 = sphi 0, %s64
      %s79 = sphi 0, %s65
      %s83 = sphi 0, %s83
      %s85 = sphi 0, %s83
      %s86 = sphi 0, %s85
      %s100 = sphi 0, %s86
      %s106 = sphi 0, %s108
      %s109 = sphi 0, %s106
      %s110 = sphi 0, %s109
      %s126 = sphi 0, %s110
    $region4: #{tpu_custom_call.1} parent=1 // loop_header_branch
      %17 = sbr.rel (%p15) target = $region8
    $region5: #{tpu_custom_call.1} parent=1 // loop_body
      %s19 = ssub.s32 %s14, 1
      %s20 = ssub.s32 %s14, 2
      %s27 = sadd.s32 1, %s22
      %p28 = scmp.ge.s32.totalorder %s27, 2
      %s29 = scalar_select %p28, 0, %s27
      %s30 = sadd.s32 1, %s21
      %s31 = scalar_select %p28, %s30, %s21
      %p32 = scmp.ge.s32.totalorder %s31, 1
      %s33 = scalar_select %p32, 0, %s31
      %s34 = ssub.s32 %s21, %s33
      %s35 = ssub.s32 %s22, %s29
      %s36 = sor.u32 %s34, %s35
      %p37 = scmp.eq.s32.totalorder %s36, 0
      %s39 = sadd.s32 %s38, 1
      %s40 = scalar_select %p37, %s38, %s39
      %p43 = pneg %p37
      %p44 = scmp.eq.s32.totalorder %s14, 1
      %p45 = por %p43, %p44
      %p46 = scmp.ne.s32.totalorder %s38, %s41
      %p47 = scmp.eq.s32.totalorder %s14, 0
      %p48 = por %p46, %p47
      %p49 = scmp.ne.s32.totalorder %s38, %s41
      %p50 = scmp.eq.s32.totalorder %s19, 1
      %p51 = por %p49, %p50
      %p52 = scmp.ne.s32.totalorder %s41, %s42
      %p53 = scmp.eq.s32.totalorder %s19, 0
      %p54 = por %p52, %p53
      %p55 = scmp.ne.s32.totalorder %s41, %s42
      %p56 = scmp.eq.s32.totalorder %s20, 1
      %p57 = por %p55, %p56
      %p59 = scmp.ne.s32.totalorder %s42, %s58
      %p60 = scmp.eq.s32.totalorder %s20, 0
      %p61 = por %p59, %p60
      %s63 = sadd.s32 %s62, 1
      %p66 = scmp.eq.s32.totalorder %s14, 1
      %p67 = scmp.ne.s32.totalorder %s62, %s64
      %p68 = scmp.eq.s32.totalorder %s14, 0
      %p69 = por %p67, %p68
      %p70 = scmp.ne.s32.totalorder %s62, %s64
      %p71 = scmp.eq.s32.totalorder %s19, 1
      %p72 = por %p70, %p71
      %p73 = scmp.ne.s32.totalorder %s64, %s65
      %p74 = scmp.eq.s32.totalorder %s19, 0
      %p75 = por %p73, %p74
      %p76 = scmp.ne.s32.totalorder %s64, %s65
      %p77 = scmp.eq.s32.totalorder %s20, 1
      %p78 = por %p76, %p77
      %p80 = scmp.ne.s32.totalorder %s65, %s79
      %p81 = scmp.eq.s32.totalorder %s20, 0
      %p82 = por %p80, %p81
      %s84 = sadd.s32 %s83, 1
      %p87 = scmp.eq.s32.totalorder %s14, 1
      %p88 = scmp.ne.s32.totalorder %s83, %s85
      %p89 = scmp.eq.s32.totalorder %s14, 0
      %p90 = por %p88, %p89
      %p91 = scmp.ne.s32.totalorder %s83, %s85
      %p92 = scmp.eq.s32.totalorder %s19, 1
      %p93 = por %p91, %p92
      %p94 = scmp.ne.s32.totalorder %s85, %s86
      %p95 = scmp.eq.s32.totalorder %s19, 0
      %p96 = por %p94, %p95
      %p97 = scmp.ne.s32.totalorder %s85, %s86
      %p98 = scmp.eq.s32.totalorder %s20, 1
      %p99 = por %p97, %p98
      %p101 = scmp.ne.s32.totalorder %s86, %s100
      %p102 = scmp.eq.s32.totalorder %s20, 0
      %p103 = por %p101, %p102
      %s104 = ssub.s32 %s21, %s33
      %p105 = scmp.eq.s32.totalorder %s104, 0
      %s107 = sadd.s32 %s106, 1
      %s108 = scalar_select %p105, %s106, %s107
      %p111 = pneg %p105
      %p112 = scmp.eq.s32.totalorder %s14, 1
      %p113 = por %p111, %p112
      %p114 = scmp.ne.s32.totalorder %s106, %s109
      %p115 = scmp.eq.s32.totalorder %s14, 0
      %p116 = por %p114, %p115
      %p117 = scmp.ne.s32.totalorder %s106, %s109
      %p118 = scmp.eq.s32.totalorder %s19, 1
      %p119 = por %p117, %p118
      %p120 = scmp.ne.s32.totalorder %s109, %s110
      %p121 = scmp.eq.s32.totalorder %s19, 0
      %p122 = por %p120, %p121
      %p123 = scmp.ne.s32.totalorder %s109, %s110
      %p124 = scmp.eq.s32.totalorder %s20, 1
      %p125 = por %p123, %p124
      %p127 = scmp.ne.s32.totalorder %s110, %s126
      %p128 = scmp.eq.s32.totalorder %s20, 0
      %p129 = por %p127, %p128
      %p130 = scmp.le.s32.totalorder 1, %s14
      %p131 = scmp.lt.s32.totalorder %s14, 3
      %p132 = pnand %p130, %p131
      %p133 = pneg %p132
      // Predicated region
      $region9: #{tpu_custom_call.1} parent=5 // pred_check
        _
      $region10: #{tpu_custom_call.1} parent=5 // pred_check_branch
        %135 = sbr.rel (%p132) target = $region12
      $region11: #{tpu_custom_call.1} parent=5 // pred_region
        %s136 = ssub.s32 %s14, 1
        // Predicated region
        $region13: #{tpu_custom_call.1} parent=11 // pred_check
          %p137 = pneg %p75
        $region14: #{tpu_custom_call.1} parent=11 // pred_check_branch
          %139 = sbr.rel (%p137) target = $region16
        $region15: #{tpu_custom_call.1} parent=11 // pred_region
          %s141 = ssub.s32 512, 512
          %142 = vsyncadd [#allocation7], %s141
          %s143 = sshll.u32 [#allocation6], 4
          %s144 = int_to_ptr.vmem [resolvable:$true] %s143
          %149 = dma.hbm_to_vmem [thread:$0]  %s1, 512, %s144, [#allocation7], 128, 128, 8
        $region16: #{tpu_custom_call.1} parent=11 // pred_fallthru
          _
        // Predicated region
        $region17: #{tpu_custom_call.1} parent=11 // pred_check
          %p150 = pneg %p96
        $region18: #{tpu_custom_call.1} parent=11 // pred_check_branch
          %152 = sbr.rel (%p150) target = $region20
        $region19: #{tpu_custom_call.1} parent=11 // pred_region
          _
        $region20: #{tpu_custom_call.1} parent=11 // pred_fallthru
          _
      $region12: #{tpu_custom_call.1} parent=5 // pred_fallthru
        _
      %p153 = scmp.lt.s32.totalorder %s14, 2
      // Predicated region
      $region21: #{tpu_custom_call.1} parent=5 // pred_check
        %p154 = pneg %p153
      $region22: #{tpu_custom_call.1} parent=5 // pred_check_branch
        %156 = sbr.rel (%p154) target = $region24
      $region23: #{tpu_custom_call.1} parent=5 // pred_region
        // Predicated region
        $region25: #{tpu_custom_call.1} parent=23 // pred_check
          %p157 = pneg %p48
        $region26: #{tpu_custom_call.1} parent=23 // pred_check_branch
          %159 = sbr.rel (%p157) target = $region28
        $region27: #{tpu_custom_call.1} parent=23 // pred_region
          %s160 = sand.u32 %s38, 1
          %s161 = scalar_lea.sflag [#allocation4], %s160
          %s162 = sand.u32 %s38, 1
          %s163 = smul.addr %s162, 64
          %s164 = scalar_lea.vmem [#allocation3], %s163
          %s165 = smul.u32 2, %s21
          %s167 = ssub.s32 1024, 1024
          %168 = vsyncadd %s161, %s167
          %s169 = smul.addr %s165, 8
          %s170 = sadd.s32 %s22, %s169
          %s171 = smul.addr %s170, 128
          %s172 = scalar_lea.hbm %s0, %s171
          %s173 = sshll.u32 %s164, 4
          %s174 = int_to_ptr.vmem [resolvable:$true] %s173
          %179 = dma.hbm_to_vmem [thread:$0]  %s172, 1024, %s174, %s161, 256, 128, 8
        $region28: #{tpu_custom_call.1} parent=23 // pred_fallthru
          _
      $region24: #{tpu_custom_call.1} parent=5 // pred_fallthru
        _
      %p180 = scmp.le.s32.totalorder 1, %s14
      %p181 = scmp.lt.s32.totalorder %s14, 3
      %p182 = pnand %p180, %p181
      %p183 = pneg %p182
      // Predicated region
      $region29: #{tpu_custom_call.1} parent=5 // pred_check
        _
      $region30: #{tpu_custom_call.1} parent=5 // pred_check_branch
        %185 = sbr.rel (%p182) target = $region32
      $region31: #{tpu_custom_call.1} parent=5 // pred_region
        %s186 = ssub.s32 %s14, 1
        %s187 = sand.u32 %s41, 1
        %s188 = scalar_lea.sflag [#allocation4], %s187
        %s189 = sand.u32 %s41, 1
        %s190 = smul.addr %s189, 64
        %s191 = scalar_lea.vmem [#allocation3], %s190
        // Predicated region
        $region33: #{tpu_custom_call.1} parent=31 // pred_check
          %p192 = pneg %p54
        $region34: #{tpu_custom_call.1} parent=31 // pred_check_branch
          %194 = sbr.rel (%p192) target = $region36
        $region35: #{tpu_custom_call.1} parent=31 // pred_region
          %195 = dma.done %s188, 1024
        $region36: #{tpu_custom_call.1} parent=31 // pred_fallthru
          _
        // Predicated region
        $region37: #{tpu_custom_call.1} parent=31 // pred_check
          %p196 = pneg %p75
        $region38: #{tpu_custom_call.1} parent=31 // pred_check_branch
          %198 = sbr.rel (%p196) target = $region40
        $region39: #{tpu_custom_call.1} parent=31 // pred_region
          %199 = dma.done [#allocation7], 512
        $region40: #{tpu_custom_call.1} parent=31 // pred_fallthru
          _
        %s200 = sand.u32 %s41, 1
        %s201 = scalar_lea.sflag [#allocation4], %s200
        %s202 = sand.u32 %s41, 1
        %s203 = smul.addr %s202, 64
        %s204 = scalar_lea.vmem [#allocation3], %s203
        %p205 = pneg %p54
        %p206 = pneg %p51
        %p207 = pneg %p75
        %p208 = pneg %p72
        %p209 = pneg %p96
        %p210 = pneg %p93
        %p211 = pneg %p122
        %p212 = pneg %p119
        %s213 = smul.u32 2, %s23
        %p214 = scmp.eq.s32.totalorder %s24, 0
        // Predicated region
        $region41: #{tpu_custom_call.1} parent=31 // pred_check
          %p215 = pneg %p214
        $region42: #{tpu_custom_call.1} parent=31 // pred_check_branch
          %217 = sbr.rel (%p215) target = $region44
        $region43: #{tpu_custom_call.1} parent=31 // pred_region
          %vm218 = vcmask 254976
          %219 = vst.msk [vmem:[#allocation2] sm:$0x3] %vm218, 0.0
        $region44: #{tpu_custom_call.1} parent=31 // pred_fallthru
          _
        %v220 = vld [vmem:[#allocation2] sm:$0x3]
        %v221 = vld [vmem:[%s191] sm:$0xff]
        %v222 = vld [vmem:[%s191 + $0x8] sm:$0xff]
        %v223 = vld [vmem:[%s191 + $0x10] sm:$0xff]
        %v224 = vld [vmem:[%s191 + $0x18] sm:$0xff]
        %v225 = vld [vmem:[%s191 + $0x20] sm:$0xff]
        %v226 = vld [vmem:[%s191 + $0x28] sm:$0xff]
        %v227 = vld [vmem:[%s191 + $0x30] sm:$0xff]
        %v228 = vld [vmem:[%s191 + $0x38] sm:$0xff]
        %229 = vadd.xlane.f32.xlu0 %v221
        %v230 = vpop.xlane.xlu0 %229
        %231 = vadd.xlane.f32.xlu0 %v222
        %v232 = vpop.xlane.xlu0 %231
        %233 = vadd.xlane.f32.xlu0 %v223
        %v234 = vpop.xlane.xlu0 %233
        %235 = vadd.xlane.f32.xlu0 %v224
        %v236 = vpop.xlane.xlu0 %235
        %237 = vadd.xlane.f32.xlu0 %v225
        %v238 = vpop.xlane.xlu0 %237
        %239 = vadd.xlane.f32.xlu0 %v226
        %v240 = vpop.xlane.xlu0 %239
        %241 = vadd.xlane.f32.xlu0 %v227
        %v242 = vpop.xlane.xlu0 %241
        %243 = vadd.xlane.f32.xlu0 %v228
        %v244 = vpop.xlane.xlu0 %243
        %v253 = vlaneseq
        %v254 = vand.u32 %v253, 127
        %v255 = vlaneseq
        %v256 = vshrl.u32 %v255, 7
        %v257 = vsub.s32 %v254, %v256
        %v258 = vrot.slane %v230, %v257
        %v259 = vadd.s32 %v254, 4294967288
        %v260 = vlaneseq
        %v261 = vshrl.u32 %v260, 7
        %v262 = vsub.s32 %v259, %v261
        %v263 = vrot.slane %v232, %v262
        %vm264 = vcmask 130112
        %v265 = vsel %vm264, %v263, %v258
        %v266 = vadd.s32 %v254, 4294967280
        %v267 = vlaneseq
        %v268 = vshrl.u32 %v267, 7
        %v269 = vsub.s32 %v266, %v268
        %v270 = vrot.slane %v234, %v269
        %vm271 = vcmask 195712
        %v272 = vsel %vm271, %v270, %v265
        %v273 = vadd.s32 %v254, 4294967272
        %v274 = vlaneseq
        %v275 = vshrl.u32 %v274, 7
        %v276 = vsub.s32 %v273, %v275
        %v277 = vrot.slane %v236, %v276
        %vm278 = vcmask 261312
        %v279 = vsel %vm278, %v277, %v272
        %v280 = vlaneseq
        %v281 = vshrl.u32 %v280, 7
        %v282 = vsub.s32 %v254, %v281
        %v283 = vrot.slane %v238, %v282
        %v284 = vlaneseq
        %v285 = vshrl.u32 %v284, 7
        %v286 = vsub.s32 %v259, %v285
        %v287 = vrot.slane %v240, %v286
        %v288 = vsel %vm264, %v287, %v283
        %v289 = vlaneseq
        %v290 = vshrl.u32 %v289, 7
        %v291 = vsub.s32 %v266, %v290
        %v292 = vrot.slane %v242, %v291
        %v293 = vsel %vm271, %v292, %v288
        %v294 = vlaneseq
        %v295 = vshrl.u32 %v294, 7
        %v296 = vsub.s32 %v273, %v295
        %v297 = vrot.slane %v244, %v296
        %v298 = vsel %vm278, %v297, %v293
        %vm299 = vcmask 1041409
        %v300 = vsel %vm299, %v298, %v279
        %v302 = vadd.f32 %v220, %v300
        %vm303 = vcmask 254976
        %304 = vst.msk [vmem:[#allocation2] sm:$0x3] %vm303, %v302
        %p305 = scmp.eq.s32.totalorder %s24, 1
        // Predicated region
        $region45: #{tpu_custom_call.1} parent=31 // pred_check
          %p306 = pneg %p305
        $region46: #{tpu_custom_call.1} parent=31 // pred_check_branch
          %308 = sbr.rel (%p306) target = $region48
        $region47: #{tpu_custom_call.1} parent=31 // pred_region
          %v309 = vld [vmem:[#allocation2] sm:$0x3]
          %v310 = vld [vmem:[#allocation6] sm:$0xff]
          %v311 = vld [vmem:[#allocation6 + $0x8] sm:$0xff]
          %v312 = vld [vmem:[#allocation6 + $0x10] sm:$0xff]
          %v313 = vld [vmem:[#allocation6 + $0x18] sm:$0xff]
          %v314 = vld [vmem:[%s2] sm:$0x1]
          %v316 = vlaneseq
          %v317 = vshrl.u32 %v316, 7
          %v318 = vsub.s32 0, %v317
          %v319 = vrot.slane %v314, %v318
          %vm321 = vcmask 261120
          %v323 = vsel %vm321, %v309, 0
          %325 = vmatprep.subr.mxu0 0.0
          %326 = vmatpush1.msra.mxu0 %v310
          %327 = vmatprep.subr.mxu0 0.0
          %328 = vmatpush1.msra.mxu0 %v311
          %329 = vmatprep.subr.mxu0 0.0
          %330 = vmatpush1.msra.mxu0 %v312
          %331 = vmatprep.subr.mxu0 0.0
          %332 = vmatpush1.msra.mxu0 %v313
          %333 = vmatprep.subr.mxu0 0.0
          %334 = vmatpush1.msra.mxu0 0.0
          %335 = vmatprep.subr.mxu0 0.0
          %336 = vmatpush1.msra.mxu0 0.0
          %337 = vmatprep.subr.mxu0 0.0
          %338 = vmatpush1.msra.mxu0 0.0
          %339 = vmatprep.subr.mxu0 0.0
          %340 = vmatpush1.msra.mxu0 0.0
          %341 = vmatprep.subr.mxu0 0.0
          %342 = vmatpush1.msra.mxu0 0.0
          %343 = vmatprep.subr.mxu0 0.0
          %344 = vmatpush1.msra.mxu0 0.0
          %345 = vmatprep.subr.mxu0 0.0
          %346 = vmatpush1.msra.mxu0 0.0
          %347 = vmatprep.subr.mxu0 0.0
          %348 = vmatpush1.msra.mxu0 0.0
          %349 = vmatprep.subr.mxu0 0.0
          %350 = vmatpush1.msra.mxu0 0.0
          %351 = vmatprep.subr.mxu0 0.0
          %352 = vmatpush1.msra.mxu0 0.0
          %353 = vmatprep.subr.mxu0 0.0
          %354 = vmatpush1.msra.mxu0 0.0
          %355 = vmatprep.subr.mxu0 0.0
          %356 = vmatpush1.msra.mxu0 0.0
          %357 = vmatprep.subr.mxu0 0.0
          %358 = vmatpush1.msra.mxu0 0.0
          %359 = vmatprep.subr.mxu0 0.0
          %360 = vmatpush1.msra.mxu0 0.0
          %361 = vmatprep.subr.mxu0 0.0
          %362 = vmatpush1.msra.mxu0 0.0
          %363 = vmatprep.subr.mxu0 0.0
          %364 = vmatpush1.msra.mxu0 0.0
          %365 = vmatprep.subr.mxu0 0.0
          %366 = vmatpush1.msra.mxu0 0.0
          %367 = vmatprep.subr.mxu0 0.0
          %368 = vmatpush1.msra.mxu0 0.0
          %369 = vmatprep.subr.mxu0 0.0
          %370 = vmatpush1.msra.mxu0 0.0
          %371 = vmatprep.subr.mxu0 0.0
          %372 = vmatpush1.msra.mxu0 0.0
          %373 = vmatprep.subr.mxu0 0.0
          %374 = vmatpush1.msra.mxu0 0.0
          %375 = vmatprep.subr.mxu0 0.0
          %376 = vmatpush1.msra.mxu0 0.0
          %377 = vmatprep.subr.mxu0 0.0
          %378 = vmatpush1.msra.mxu0 0.0
          %379 = vmatprep.subr.mxu0 0.0
          %380 = vmatpush1.msra.mxu0 0.0
          %381 = vmatprep.subr.mxu0 0.0
          %382 = vmatpush1.msra.mxu0 0.0
          %383 = vmatprep.subr.mxu0 0.0
          %384 = vmatpush1.msra.mxu0 0.0
          %385 = vmatprep.subr.mxu0 0.0
          %386 = vmatpush1.msra.mxu0 0.0
          %387 = vmatprep.subr.mxu0 0.0
          %388 = vmatpush1.msra.mxu0 0.0
          %389 = vmatprep.mubr.f32.mxu0 0.0
          %390 = vmatmul.mubr.f32.gmra.mrb[0].mxu0 %v323
          %v391 = vpop.f32.mrb[0].mxu0
          %v392 = vadd.f32 %v319, %v391
          %v393 = vpop.f32.mrb[0].mxu0
          %394 = vdwg.mxu0
          %395 = vst [vmem:[#allocation8] sm:$0x3] %v392
        $region48: #{tpu_custom_call.1} parent=31 // pred_fallthru
          _
        // Predicated region
        $region49: #{tpu_custom_call.1} parent=31 // pred_check
          %p396 = pneg %p119
        $region50: #{tpu_custom_call.1} parent=31 // pred_check_branch
          %398 = sbr.rel (%p396) target = $region52
        $region51: #{tpu_custom_call.1} parent=31 // pred_region
          %s400 = ssub.s32 32, 32
          %401 = vsyncadd [#allocation5], %s400
          %s402 = smul.addr %s23, 32
          %s403 = scalar_lea.hbm %s3, %s402
          %s405 = sshll.u32 [#allocation8], 4
          %s406 = int_to_ptr.vmem [resolvable:$true] %s405
          %408 = dma.vmem_to_hbm [thread:$0]  %s406, 32, %s403, [#allocation5]
        $region52: #{tpu_custom_call.1} parent=31 // pred_fallthru
          _
        // Predicated region
        $region53: #{tpu_custom_call.1} parent=31 // pred_check
          %p409 = pneg %p119
        $region54: #{tpu_custom_call.1} parent=31 // pred_check_branch
          %411 = sbr.rel (%p409) target = $region56
        $region55: #{tpu_custom_call.1} parent=31 // pred_region
          %412 = dma.done [#allocation5], 32
        $region56: #{tpu_custom_call.1} parent=31 // pred_fallthru
          _
      $region32: #{tpu_custom_call.1} parent=5 // pred_fallthru
        _
      %p413 = scmp.le.s32.totalorder 2, %s14
      // Predicated region
      $region57: #{tpu_custom_call.1} parent=5 // pred_check
        %p414 = pneg %p413
      $region58: #{tpu_custom_call.1} parent=5 // pred_check_branch
        %416 = sbr.rel (%p414) target = $region60
      $region59: #{tpu_custom_call.1} parent=5 // pred_region
        %s417 = ssub.s32 %s14, 2
      $region60: #{tpu_custom_call.1} parent=5 // pred_fallthru
        _
    $region6: #{tpu_custom_call.1} parent=1 // loop_footer
      %s18 = sadd.s32 1, %s14
    $region7: #{tpu_custom_call.1} parent=1 // loop_footer_branch
      %13 = sbr.rel target = $region3
    $region8: #{tpu_custom_call.1} parent=1 // loop_exit
      _
    %418 = vsyncpa [#allocation4], 1
    %s419 = scalar_lea.sflag [#allocation4], 1
    %420 = vsyncpa %s419, 1
    %421 = vsyncpa [#allocation7], 1
    %422 = vsyncpa [#allocation5], 1
    %s423 = scalar_lea.sflag [#allocation5], 1
    %424 = vsyncpa %s423, 1

</llo_original>
